<compile_context>
chip_gen: v7x
topology: tpu7x:2x2x1
jax: 0.10.0
libtpu: 0.0.40
codegen_flags: <defaults>
</compile_context>

<pallas_src>
import jax
import jax.numpy as jnp
from jax.experimental import pallas as pl
from jax.experimental.pallas import tpu as pltpu


# ----------------------------------------------------------------------------
# Path A: small channel counts -> VPU contraction, mode axis on lanes.
# ----------------------------------------------------------------------------
def _vpu_modes_kernel(xs_ref, ws_ref, os_ref):
    """xs_ref: [2, B, Ci, TM]  ws_ref: [2, Ci, Co, TM]  os_ref: [2, B, Co, TM].

    out[b, o, m] = sum_i x[b, i, m] * w[i, o, m]  (complex), with the mode axis
    on lanes so every vreg is 128-lane dense and stores are unmasked.
    """
    xr = xs_ref[0]  # [B, Ci, TM]
    xi = xs_ref[1]
    wr = ws_ref[0]  # [Ci, Co, TM]
    wi = ws_ref[1]
    ci = xr.shape[1]

    out_r = None
    out_i = None
    # Static unroll over the (small) input-channel count; pure VPU FMAs.
    for i in range(ci):
        a = xr[:, i, None, :]   # [B, 1, TM]
        b = xi[:, i, None, :]
        c = wr[i][None, :, :]   # [1, Co, TM]
        d = wi[i][None, :, :]
        rr = a * c - b * d
        im = a * d + b * c
        out_r = rr if out_r is None else out_r + rr
        out_i = im if out_i is None else out_i + im

    os_ref[0] = out_r
    os_ref[1] = out_i


def _modes_contract_vpu(xc, wc):
    """xc: complex64 [B, Ci, M], wc: complex64 [Ci, Co, M] -> complex64 [B, Co, M]."""
    B, Ci, M = xc.shape
    Co = wc.shape[1]

    LANE = 128
    # Modes per grid step: multiple of 128 lanes, capped so larger problems
    # still expose several grid blocks (v7x 2-TC sharding of the parallel axis).
    TM = LANE * min(max(pl.cdiv(M, LANE), 1), 8)
    Mp = TM * pl.cdiv(M, TM)
    pad = Mp - M

    xs = jnp.stack([jnp.real(xc), jnp.imag(xc)]).astype(jnp.float32)  # [2, B, Ci, M]
    ws = jnp.stack([jnp.real(wc), jnp.imag(wc)]).astype(jnp.float32)  # [2, Ci, Co, M]
    if pad:
        xs = jnp.pad(xs, ((0, 0), (0, 0), (0, 0), (0, pad)))
        ws = jnp.pad(ws, ((0, 0), (0, 0), (0, 0), (0, pad)))

    x_spec = pl.BlockSpec((2, B, Ci, TM), lambda m: (0, 0, 0, m))
    w_spec = pl.BlockSpec((2, Ci, Co, TM), lambda m: (0, 0, 0, m))
    o_spec = pl.BlockSpec((2, B, Co, TM), lambda m: (0, 0, 0, m))

    out = pl.pallas_call(
        _vpu_modes_kernel,
        out_shape=jax.ShapeDtypeStruct((2, B, Co, Mp), jnp.float32),
        grid=(Mp // TM,),
        in_specs=[x_spec, w_spec],
        out_specs=o_spec,
        compiler_params=pltpu.CompilerParams(
            dimension_semantics=("parallel",),
            vmem_limit_bytes=32 << 20,  # safe on v5e/v6e (128 MiB) and v7x (64 MiB)
        ),
    )(xs, ws)

    out_c = jax.lax.complex(out[0], out[1])  # [B, Co, Mp]
    return out_c[..., :M]


# ----------------------------------------------------------------------------
# Path B: larger channel counts -> blocked batched matmul on the MXU.
# ----------------------------------------------------------------------------
def _mxu_modes_kernel(xs_ref, ws_ref, os_ref):
    """xs_ref: [2, TM, B, Ci]  ws_ref: [2, TM, Ci, Co]  os_ref: [2, TM, B, Co].

    3-multiplication complex product: cuts MXU work by 25% vs. 4 matmuls.
      rr = xr@wr, ii = xi@wi, t = (xr+xi)@(wr+wi)
      real = rr - ii, imag = t - rr - ii
    """
    xr = xs_ref[0]  # [TM, B, Ci]
    xi = xs_ref[1]
    wr = ws_ref[0]  # [TM, Ci, Co]
    wi = ws_ref[1]

    rr = jnp.einsum("mbi,mio->mbo", xr, wr, preferred_element_type=jnp.float32)
    ii = jnp.einsum("mbi,mio->mbo", xi, wi, preferred_element_type=jnp.float32)
    t = jnp.einsum("mbi,mio->mbo", xr + xi, wr + wi,
                   preferred_element_type=jnp.float32)

    os_ref[0] = rr - ii
    os_ref[1] = t - rr - ii


def _modes_contract_mxu(xc, wc):
    """xc: complex64 [B, Ci, M], wc: complex64 [Ci, Co, M] -> complex64 [B, Co, M]."""
    B, Ci, M = xc.shape
    Co = wc.shape[1]

    TM = 16  # modes per grid step: amortizes per-step overhead, a few KB per DMA
    Mp = TM * pl.cdiv(M, TM)
    pad = Mp - M

    # Mode-major layout: each grid step is a TM-deep batched [B,Ci]x[Ci,Co] matmul.
    xb = jnp.transpose(xc, (2, 0, 1))  # [M, B, Ci]
    wb = jnp.transpose(wc, (2, 0, 1))  # [M, Ci, Co]
    xs = jnp.stack([jnp.real(xb), jnp.imag(xb)]).astype(jnp.float32)  # [2, M, B, Ci]
    ws = jnp.stack([jnp.real(wb), jnp.imag(wb)]).astype(jnp.float32)  # [2, M, Ci, Co]
    if pad:
        xs = jnp.pad(xs, ((0, 0), (0, pad), (0, 0), (0, 0)))
        ws = jnp.pad(ws, ((0, 0), (0, pad), (0, 0), (0, 0)))

    # TODO(synk): on v6e an additional ~2x is available by feeding bf16 into the
    # MXU (keep f32 accumulate); kept f32 here to stay within FFT round-trip tol.
    x_spec = pl.BlockSpec((2, TM, B, Ci), lambda m: (0, m, 0, 0))
    w_spec = pl.BlockSpec((2, TM, Ci, Co), lambda m: (0, m, 0, 0))
    o_spec = pl.BlockSpec((2, TM, B, Co), lambda m: (0, m, 0, 0))

    out = pl.pallas_call(
        _mxu_modes_kernel,
        out_shape=jax.ShapeDtypeStruct((2, Mp, B, Co), jnp.float32),
        grid=(Mp // TM,),
        in_specs=[x_spec, w_spec],
        out_specs=o_spec,
        compiler_params=pltpu.CompilerParams(
            dimension_semantics=("parallel",),
            vmem_limit_bytes=32 << 20,
        ),
    )(xs, ws)

    out_c = jax.lax.complex(out[0], out[1])  # [Mp, B, Co]
    return jnp.transpose(out_c[:M], (1, 2, 0))  # [B, Co, M]


def _spectral_modes_contract(xc, wc):
    """Dispatch: tiny channel counts go to the lane-dense VPU path."""
    _, Ci, _ = xc.shape
    Co = wc.shape[1]
    if Ci <= 16 and Co <= 16:
        return _modes_contract_vpu(xc, wc)
    return _modes_contract_mxu(xc, wc)


# ----------------------------------------------------------------------------
# SpectralConv2d forward
# ----------------------------------------------------------------------------
def spectral_conv2d(x, weights1, weights2, modes1, modes2):
    """x: float32 [B, C_in, H, W]; weights*: complex64 [C_in, C_out, m1, m2]."""
    B, Ci, H, W = x.shape
    Co = weights1.shape[1]
    Wf = W // 2 + 1
    M = modes1 * modes2

    # TODO(synk): FFT has no clean Pallas equivalent; rfft2/irfft2 run in plain JAX.
    x_ft = jnp.fft.rfft2(x)  # complex64 [B, Ci, H, Wf]

    # Fuse both frequency corners into one contraction along the mode axis.
    x1 = x_ft[:, :, :modes1, :modes2].reshape(B, Ci, M)
    x2 = x_ft[:, :, H - modes1:, :modes2].reshape(B, Ci, M)
    xc = jnp.concatenate([x1, x2], axis=-1)  # [B, Ci, 2M]
    wc = jnp.concatenate(
        [weights1.reshape(Ci, Co, M), weights2.reshape(Ci, Co, M)], axis=-1
    )  # [Ci, Co, 2M]

    out = _spectral_modes_contract(xc, wc)  # complex64 [B, Co, 2M]
    out1 = out[..., :M].reshape(B, Co, modes1, modes2)
    out2 = out[..., M:].reshape(B, Co, modes1, modes2)

    out_ft = jnp.zeros((B, Co, H, Wf), dtype=jnp.complex64)
    out_ft = out_ft.at[:, :, :modes1, :modes2].set(out1)
    out_ft = out_ft.at[:, :, H - modes1:, :modes2].set(out2)

    x_out = jnp.fft.irfft2(out_ft, s=(H, W))  # float32 [B, Co, H, W]
    return x_out.astype(x.dtype)


def init_params(key, in_channels, out_channels, modes1, modes2):
    """Mirrors torch: scale * rand(..., dtype=cfloat) (re/im each U[0,1))."""
    scale = 1.0 / (in_channels * out_channels)
    k1r, k1i, k2r, k2i = jax.random.split(key, 4)
    shape = (in_channels, out_channels, modes1, modes2)
    w1 = scale * jax.lax.complex(
        jax.random.uniform(k1r, shape, dtype=jnp.float32),
        jax.random.uniform(k1i, shape, dtype=jnp.float32),
    )
    w2 = scale * jax.lax.complex(
        jax.random.uniform(k2r, shape, dtype=jnp.float32),
        jax.random.uniform(k2i, shape, dtype=jnp.float32),
    )
    return w1, w2


def _reference(x, w1, w2, modes1, modes2):
    B, Ci, H, W = x.shape
    Co = w1.shape[1]
    x_ft = jnp.fft.rfft2(x)
    o1 = jnp.einsum("bixy,ioxy->boxy", x_ft[:, :, :modes1, :modes2], w1)
    o2 = jnp.einsum("bixy,ioxy->boxy", x_ft[:, :, H - modes1:, :modes2], w2)
    out_ft = jnp.zeros((B, Co, H, W // 2 + 1), dtype=jnp.complex64)
    out_ft = out_ft.at[:, :, :modes1, :modes2].set(o1)
    out_ft = out_ft.at[:, :, H - modes1:, :modes2].set(o2)
    return jnp.fft.irfft2(out_ft, s=(H, W))


if __name__ == "__main__":
    key = jax.random.PRNGKey(0)

    # --- small-channel config (lane-dense VPU path), matches the module spec ---
    B, Ci, Co = 2, 4, 4
    H, W = 16, 16
    m1, m2 = 4, 4
    kx, kw, key = jax.random.split(key, 3)
    x = jax.random.normal(kx, (B, Ci, H, W), dtype=jnp.float32)
    w1, w2 = init_params(kw, Ci, Co, m1, m2)

    fwd = jax.jit(lambda a, b, c: spectral_conv2d(a, b, c, m1, m2))
    out = fwd(x, w1, w2)
    jax.block_until_ready(out)
    assert out.shape == (B, Co, H, W), out.shape
    assert out.dtype == jnp.float32, out.dtype
    ref_out = _reference(x, w1, w2, m1, m2)
    assert jnp.allclose(out, ref_out, atol=1e-4, rtol=1e-4)

    # --- larger-channel config (MXU mode-blocked path) ---
    B2, Ci2, Co2 = 4, 32, 32
    H2, W2 = 32, 32
    m1b, m2b = 8, 8
    kx2, kw2 = jax.random.split(key)
    x2 = jax.random.normal(kx2, (B2, Ci2, H2, W2), dtype=jnp.float32)
    w1b, w2b = init_params(kw2, Ci2, Co2, m1b, m2b)

    fwd2 = jax.jit(lambda a, b, c: spectral_conv2d(a, b, c, m1b, m2b))
    out2 = fwd2(x2, w1b, w2b)
    jax.block_until_ready(out2)
    ref2 = _reference(x2, w1b, w2b, m1b, m2b)
    rel_err = jnp.max(jnp.abs(out2 - ref2)) / (jnp.max(jnp.abs(ref2)) + 1e-12)
    assert rel_err < 1e-3, float(rel_err)

    print("KERNEL_OK")
</pallas_src>

<mosaic_0001>
module attributes {stable_mosaic.version = 11 : i64} {
  func.func @_vpu_modes_kernel(%arg0: i32, %arg1: memref<2x2x4x128xf32, #tpu.memory_space<vmem>>, %arg2: memref<2x4x4x128xf32, #tpu.memory_space<vmem>>, %arg3: memref<2x2x4x128xf32, #tpu.memory_space<vmem>>) attributes {dimension_semantics = [#tpu.dimension_semantics<parallel>], iteration_bounds = array<i64: 1>, scalar_prefetch = 0 : i64, scratch_operands = 0 : i64, tpu.core_type = #tpu.core_type<tc>, window_params = [{transform_indices = @transform_0, window_bounds = array<i64: 2, 2, 4, 128>}, {transform_indices = @transform_1, window_bounds = array<i64: 2, 4, 4, 128>}, {transform_indices = @transform_2, window_bounds = array<i64: 2, 2, 4, 128>}]} {
    %c0 = arith.constant 0 : index
    %c0_0 = arith.constant 0 : index
    %c0_1 = arith.constant 0 : index
    %c0_2 = arith.constant 0 : index
    %0 = vector.load %arg1[%c0, %c0_0, %c0_1, %c0_2] : memref<2x2x4x128xf32, #tpu.memory_space<vmem>>, vector<1x2x4x128xf32>
    %1 = vector.shape_cast %0 : vector<1x2x4x128xf32> to vector<2x4x128xf32>
    %c1 = arith.constant 1 : index
    %c0_3 = arith.constant 0 : index
    %c0_4 = arith.constant 0 : index
    %c0_5 = arith.constant 0 : index
    %2 = vector.load %arg1[%c1, %c0_3, %c0_4, %c0_5] : memref<2x2x4x128xf32, #tpu.memory_space<vmem>>, vector<1x2x4x128xf32>
    %3 = vector.shape_cast %2 : vector<1x2x4x128xf32> to vector<2x4x128xf32>
    %c0_6 = arith.constant 0 : index
    %c0_7 = arith.constant 0 : index
    %c0_8 = arith.constant 0 : index
    %c0_9 = arith.constant 0 : index
    %4 = vector.load %arg2[%c0_6, %c0_7, %c0_8, %c0_9] : memref<2x4x4x128xf32, #tpu.memory_space<vmem>>, vector<1x4x4x128xf32>
    %5 = vector.shape_cast %4 : vector<1x4x4x128xf32> to vector<4x4x128xf32>
    %c1_10 = arith.constant 1 : index
    %c0_11 = arith.constant 0 : index
    %c0_12 = arith.constant 0 : index
    %c0_13 = arith.constant 0 : index
    %6 = vector.load %arg2[%c1_10, %c0_11, %c0_12, %c0_13] : memref<2x4x4x128xf32, #tpu.memory_space<vmem>>, vector<1x4x4x128xf32>
    %7 = vector.shape_cast %6 : vector<1x4x4x128xf32> to vector<4x4x128xf32>
    %8 = vector.extract_strided_slice %1 {offsets = [0, 0, 0], sizes = [2, 1, 128], strides = [1, 1, 1]} : vector<2x4x128xf32> to vector<2x1x128xf32>
    %9 = vector.shape_cast %8 : vector<2x1x128xf32> to vector<2x128xf32>
    %10 = vector.shape_cast %9 : vector<2x128xf32> to vector<2x1x128xf32>
    %11 = vector.extract_strided_slice %3 {offsets = [0, 0, 0], sizes = [2, 1, 128], strides = [1, 1, 1]} : vector<2x4x128xf32> to vector<2x1x128xf32>
    %12 = vector.shape_cast %11 : vector<2x1x128xf32> to vector<2x128xf32>
    %13 = vector.shape_cast %12 : vector<2x128xf32> to vector<2x1x128xf32>
    %14 = vector.extract_strided_slice %5 {offsets = [0, 0, 0], sizes = [1, 4, 128], strides = [1, 1, 1]} : vector<4x4x128xf32> to vector<1x4x128xf32>
    %15 = vector.shape_cast %14 : vector<1x4x128xf32> to vector<4x128xf32>
    %16 = vector.shape_cast %15 : vector<4x128xf32> to vector<1x4x128xf32>
    %17 = vector.extract_strided_slice %7 {offsets = [0, 0, 0], sizes = [1, 4, 128], strides = [1, 1, 1]} : vector<4x4x128xf32> to vector<1x4x128xf32>
    %18 = vector.shape_cast %17 : vector<1x4x128xf32> to vector<4x128xf32>
    %19 = vector.shape_cast %18 : vector<4x128xf32> to vector<1x4x128xf32>
    %20 = vector.broadcast %10 : vector<2x1x128xf32> to vector<2x4x128xf32>
    %21 = vector.broadcast %16 : vector<1x4x128xf32> to vector<2x4x128xf32>
    %22 = arith.mulf %20, %21 : vector<2x4x128xf32>
    %23 = vector.broadcast %13 : vector<2x1x128xf32> to vector<2x4x128xf32>
    %24 = vector.broadcast %19 : vector<1x4x128xf32> to vector<2x4x128xf32>
    %25 = arith.mulf %23, %24 : vector<2x4x128xf32>
    %26 = arith.subf %22, %25 : vector<2x4x128xf32>
    %27 = vector.broadcast %10 : vector<2x1x128xf32> to vector<2x4x128xf32>
    %28 = vector.broadcast %19 : vector<1x4x128xf32> to vector<2x4x128xf32>
    %29 = arith.mulf %27, %28 : vector<2x4x128xf32>
    %30 = vector.broadcast %13 : vector<2x1x128xf32> to vector<2x4x128xf32>
    %31 = vector.broadcast %16 : vector<1x4x128xf32> to vector<2x4x128xf32>
    %32 = arith.mulf %30, %31 : vector<2x4x128xf32>
    %33 = arith.addf %29, %32 : vector<2x4x128xf32>
    %34 = vector.extract_strided_slice %1 {offsets = [0, 1, 0], sizes = [2, 1, 128], strides = [1, 1, 1]} : vector<2x4x128xf32> to vector<2x1x128xf32>
    %35 = vector.shape_cast %34 : vector<2x1x128xf32> to vector<2x128xf32>
    %36 = vector.shape_cast %35 : vector<2x128xf32> to vector<2x1x128xf32>
    %37 = vector.extract_strided_slice %3 {offsets = [0, 1, 0], sizes = [2, 1, 128], strides = [1, 1, 1]} : vector<2x4x128xf32> to vector<2x1x128xf32>
    %38 = vector.shape_cast %37 : vector<2x1x128xf32> to vector<2x128xf32>
    %39 = vector.shape_cast %38 : vector<2x128xf32> to vector<2x1x128xf32>
    %40 = vector.extract_strided_slice %5 {offsets = [1, 0, 0], sizes = [1, 4, 128], strides = [1, 1, 1]} : vector<4x4x128xf32> to vector<1x4x128xf32>
    %41 = vector.shape_cast %40 : vector<1x4x128xf32> to vector<4x128xf32>
    %42 = vector.shape_cast %41 : vector<4x128xf32> to vector<1x4x128xf32>
    %43 = vector.extract_strided_slice %7 {offsets = [1, 0, 0], sizes = [1, 4, 128], strides = [1, 1, 1]} : vector<4x4x128xf32> to vector<1x4x128xf32>
    %44 = vector.shape_cast %43 : vector<1x4x128xf32> to vector<4x128xf32>
    %45 = vector.shape_cast %44 : vector<4x128xf32> to vector<1x4x128xf32>
    %46 = vector.broadcast %36 : vector<2x1x128xf32> to vector<2x4x128xf32>
    %47 = vector.broadcast %42 : vector<1x4x128xf32> to vector<2x4x128xf32>
    %48 = arith.mulf %46, %47 : vector<2x4x128xf32>
    %49 = vector.broadcast %39 : vector<2x1x128xf32> to vector<2x4x128xf32>
    %50 = vector.broadcast %45 : vector<1x4x128xf32> to vector<2x4x128xf32>
    %51 = arith.mulf %49, %50 : vector<2x4x128xf32>
    %52 = arith.subf %48, %51 : vector<2x4x128xf32>
    %53 = vector.broadcast %36 : vector<2x1x128xf32> to vector<2x4x128xf32>
    %54 = vector.broadcast %45 : vector<1x4x128xf32> to vector<2x4x128xf32>
    %55 = arith.mulf %53, %54 : vector<2x4x128xf32>
    %56 = vector.broadcast %39 : vector<2x1x128xf32> to vector<2x4x128xf32>
    %57 = vector.broadcast %42 : vector<1x4x128xf32> to vector<2x4x128xf32>
    %58 = arith.mulf %56, %57 : vector<2x4x128xf32>
    %59 = arith.addf %55, %58 : vector<2x4x128xf32>
    %60 = arith.addf %26, %52 : vector<2x4x128xf32>
    %61 = arith.addf %33, %59 : vector<2x4x128xf32>
    %62 = vector.extract_strided_slice %1 {offsets = [0, 2, 0], sizes = [2, 1, 128], strides = [1, 1, 1]} : vector<2x4x128xf32> to vector<2x1x128xf32>
    %63 = vector.shape_cast %62 : vector<2x1x128xf32> to vector<2x128xf32>
    %64 = vector.shape_cast %63 : vector<2x128xf32> to vector<2x1x128xf32>
    %65 = vector.extract_strided_slice %3 {offsets = [0, 2, 0], sizes = [2, 1, 128], strides = [1, 1, 1]} : vector<2x4x128xf32> to vector<2x1x128xf32>
    %66 = vector.shape_cast %65 : vector<2x1x128xf32> to vector<2x128xf32>
    %67 = vector.shape_cast %66 : vector<2x128xf32> to vector<2x1x128xf32>
    %68 = vector.extract_strided_slice %5 {offsets = [2, 0, 0], sizes = [1, 4, 128], strides = [1, 1, 1]} : vector<4x4x128xf32> to vector<1x4x128xf32>
    %69 = vector.shape_cast %68 : vector<1x4x128xf32> to vector<4x128xf32>
    %70 = vector.shape_cast %69 : vector<4x128xf32> to vector<1x4x128xf32>
    %71 = vector.extract_strided_slice %7 {offsets = [2, 0, 0], sizes = [1, 4, 128], strides = [1, 1, 1]} : vector<4x4x128xf32> to vector<1x4x128xf32>
    %72 = vector.shape_cast %71 : vector<1x4x128xf32> to vector<4x128xf32>
    %73 = vector.shape_cast %72 : vector<4x128xf32> to vector<1x4x128xf32>
    %74 = vector.broadcast %64 : vector<2x1x128xf32> to vector<2x4x128xf32>
    %75 = vector.broadcast %70 : vector<1x4x128xf32> to vector<2x4x128xf32>
    %76 = arith.mulf %74, %75 : vector<2x4x128xf32>
    %77 = vector.broadcast %67 : vector<2x1x128xf32> to vector<2x4x128xf32>
    %78 = vector.broadcast %73 : vector<1x4x128xf32> to vector<2x4x128xf32>
    %79 = arith.mulf %77, %78 : vector<2x4x128xf32>
    %80 = arith.subf %76, %79 : vector<2x4x128xf32>
    %81 = vector.broadcast %64 : vector<2x1x128xf32> to vector<2x4x128xf32>
    %82 = vector.broadcast %73 : vector<1x4x128xf32> to vector<2x4x128xf32>
    %83 = arith.mulf %81, %82 : vector<2x4x128xf32>
    %84 = vector.broadcast %67 : vector<2x1x128xf32> to vector<2x4x128xf32>
    %85 = vector.broadcast %70 : vector<1x4x128xf32> to vector<2x4x128xf32>
    %86 = arith.mulf %84, %85 : vector<2x4x128xf32>
    %87 = arith.addf %83, %86 : vector<2x4x128xf32>
    %88 = arith.addf %60, %80 : vector<2x4x128xf32>
    %89 = arith.addf %61, %87 : vector<2x4x128xf32>
    %90 = vector.extract_strided_slice %1 {offsets = [0, 3, 0], sizes = [2, 1, 128], strides = [1, 1, 1]} : vector<2x4x128xf32> to vector<2x1x128xf32>
    %91 = vector.shape_cast %90 : vector<2x1x128xf32> to vector<2x128xf32>
    %92 = vector.shape_cast %91 : vector<2x128xf32> to vector<2x1x128xf32>
    %93 = vector.extract_strided_slice %3 {offsets = [0, 3, 0], sizes = [2, 1, 128], strides = [1, 1, 1]} : vector<2x4x128xf32> to vector<2x1x128xf32>
    %94 = vector.shape_cast %93 : vector<2x1x128xf32> to vector<2x128xf32>
    %95 = vector.shape_cast %94 : vector<2x128xf32> to vector<2x1x128xf32>
    %96 = vector.extract_strided_slice %5 {offsets = [3, 0, 0], sizes = [1, 4, 128], strides = [1, 1, 1]} : vector<4x4x128xf32> to vector<1x4x128xf32>
    %97 = vector.shape_cast %96 : vector<1x4x128xf32> to vector<4x128xf32>
    %98 = vector.shape_cast %97 : vector<4x128xf32> to vector<1x4x128xf32>
    %99 = vector.extract_strided_slice %7 {offsets = [3, 0, 0], sizes = [1, 4, 128], strides = [1, 1, 1]} : vector<4x4x128xf32> to vector<1x4x128xf32>
    %100 = vector.shape_cast %99 : vector<1x4x128xf32> to vector<4x128xf32>
    %101 = vector.shape_cast %100 : vector<4x128xf32> to vector<1x4x128xf32>
    %102 = vector.broadcast %92 : vector<2x1x128xf32> to vector<2x4x128xf32>
    %103 = vector.broadcast %98 : vector<1x4x128xf32> to vector<2x4x128xf32>
    %104 = arith.mulf %102, %103 : vector<2x4x128xf32>
    %105 = vector.broadcast %95 : vector<2x1x128xf32> to vector<2x4x128xf32>
    %106 = vector.broadcast %101 : vector<1x4x128xf32> to vector<2x4x128xf32>
    %107 = arith.mulf %105, %106 : vector<2x4x128xf32>
    %108 = arith.subf %104, %107 : vector<2x4x128xf32>
    %109 = vector.broadcast %92 : vector<2x1x128xf32> to vector<2x4x128xf32>
    %110 = vector.broadcast %101 : vector<1x4x128xf32> to vector<2x4x128xf32>
    %111 = arith.mulf %109, %110 : vector<2x4x128xf32>
    %112 = vector.broadcast %95 : vector<2x1x128xf32> to vector<2x4x128xf32>
    %113 = vector.broadcast %98 : vector<1x4x128xf32> to vector<2x4x128xf32>
    %114 = arith.mulf %112, %113 : vector<2x4x128xf32>
    %115 = arith.addf %111, %114 : vector<2x4x128xf32>
    %116 = arith.addf %88, %108 : vector<2x4x128xf32>
    %117 = arith.addf %89, %115 : vector<2x4x128xf32>
    %c0_14 = arith.constant 0 : index
    %c0_15 = arith.constant 0 : index
    %c0_16 = arith.constant 0 : index
    %c0_17 = arith.constant 0 : index
    %118 = vector.load %arg3[%c0_14, %c0_15, %c0_16, %c0_17] : memref<2x2x4x128xf32, #tpu.memory_space<vmem>>, vector<1x2x4x128xf32>
    %119 = vector.shape_cast %118 : vector<1x2x4x128xf32> to vector<2x4x128xf32>
    %120 = vector.shape_cast %116 : vector<2x4x128xf32> to vector<1x2x4x128xf32>
    tpu.vector_store %arg3[%c0_14, %c0_15, %c0_16, %c0_17], %120 {strides = array<i32>} : memref<2x2x4x128xf32, #tpu.memory_space<vmem>>, vector<1x2x4x128xf32>,
    %c1_18 = arith.constant 1 : index
    %c0_19 = arith.constant 0 : index
    %c0_20 = arith.constant 0 : index
    %c0_21 = arith.constant 0 : index
    %121 = vector.load %arg3[%c1_18, %c0_19, %c0_20, %c0_21] : memref<2x2x4x128xf32, #tpu.memory_space<vmem>>, vector<1x2x4x128xf32>
    %122 = vector.shape_cast %121 : vector<1x2x4x128xf32> to vector<2x4x128xf32>
    %123 = vector.shape_cast %117 : vector<2x4x128xf32> to vector<1x2x4x128xf32>
    tpu.vector_store %arg3[%c1_18, %c0_19, %c0_20, %c0_21], %123 {strides = array<i32>} : memref<2x2x4x128xf32, #tpu.memory_space<vmem>>, vector<1x2x4x128xf32>,
    return
  }
  func.func @transform_0(%arg0: i32) -> (i32, i32, i32, i32) {
    %c0_i32 = arith.constant 0 : i32
    %c0_i32_0 = arith.constant 0 : i32
    %c0_i32_1 = arith.constant 0 : i32
    %c0_i32_2 = arith.constant 0 : i32
    return %c0_i32, %c0_i32_0, %c0_i32_1, %arg0 : i32, i32, i32, i32
  }
  func.func @transform_1(%arg0: i32) -> (i32, i32, i32, i32) {
    %c0_i32 = arith.constant 0 : i32
    %c0_i32_0 = arith.constant 0 : i32
    %c0_i32_1 = arith.constant 0 : i32
    %c0_i32_2 = arith.constant 0 : i32
    return %c0_i32, %c0_i32_0, %c0_i32_1, %arg0 : i32, i32, i32, i32
  }
  func.func @transform_2(%arg0: i32) -> (i32, i32, i32, i32) {
    %c0_i32 = arith.constant 0 : i32
    %c0_i32_0 = arith.constant 0 : i32
    %c0_i32_1 = arith.constant 0 : i32
    %c0_i32_2 = arith.constant 0 : i32
    return %c0_i32, %c0_i32_0, %c0_i32_1, %arg0 : i32, i32, i32, i32
  }
}

</mosaic_0001>

<llo_original>
// kernel: custom-call
$region0: #{custom-call}
  %s0 = inlined_call_operand.hbm [shape: c64[4,4,4,4], index: 0, kind: input, shape index: {}]
  %s1 = inlined_call_operand.vmem [shape: f32[4,4,4,4], index: 1, kind: output, shape index: {}]
  $region1: #{custom-call} parent=0
    #allocation0 [shape = 's32[1]{0}', space=sflag, size = 0x4, scoped, tag = 'scoped memory for custom-call']
    %2 = vsyncpa [#allocation0], 0
    %s3 = sshll.u32 %s1, 4
    %s4 = int_to_ptr.vmem [resolvable:$true] %s3
    %6 = dma.hbm_to_vmem [thread:$0]  %s0, 1024, %s4, [#allocation0]
    %7 = dma.done [#allocation0], 1024
    %8 = vsyncpa [#allocation0], 1

// kernel: custom-call.1
$region0: #{custom-call.1}
  %s0 = inlined_call_operand.hbm [shape: c64[4,4,4,4], index: 0, kind: input, shape index: {}]
  %s1 = inlined_call_operand.vmem [shape: f32[4,4,4,4], index: 1, kind: output, shape index: {}]
  %s2 = scalar_lea.hbm %s0, 1024
  $region1: #{custom-call.1} parent=0
    #allocation0 [shape = 's32[1]{0}', space=sflag, size = 0x4, scoped, tag = 'scoped memory for custom-call.1']
    %3 = vsyncpa [#allocation0], 0
    %s4 = sshll.u32 %s1, 4
    %s5 = int_to_ptr.vmem [resolvable:$true] %s4
    %7 = dma.hbm_to_vmem [thread:$0]  %s2, 1024, %s5, [#allocation0]
    %8 = dma.done [#allocation0], 1024
    %9 = vsyncpa [#allocation0], 1

// kernel: _lambda_.1
$region0: #{_lambda_.1}
  #allocation0 [shape = 'u32[]', space=smem, size = 0x4, offset = 0x4, fixed_abs, tag = 'smem constant byte address 0x4 - core index']
  #allocation1 [shape = 'u32[144,128]{1,0:T(1,128)}', space=vmem, size = 0x12000, scoped, tag = 'internal scratch']
  %s0 = inlined_call_operand.vmem [shape: f32[2,2,4,128], index: 0, kind: input, shape index: {}]
  %s1 = inlined_call_operand.vmem [shape: f32[2,4,4,128], index: 1, kind: input, shape index: {}]
  %s2 = inlined_call_operand.vmem [shape: f32[2,2,4,128], index: 2, kind: output, shape index: {}]
  %s3 = sld [smem:[#allocation0]]
  $region18: #{_lambda_.1} parent=0
    _
  %s5 = ssub.s32 1, %s3
  %s6 = scalar_select 0, %s5, %s3
  // Predicated region
  $region2: #{_lambda_.1} parent=0 // pred_check
    _
  $region3: #{_lambda_.1} parent=0 // pred_check_branch
    %8 = sbr.rel (0) target = $region5
  $region4: #{_lambda_.1} parent=0 // pred_region
    _
  $region5: #{_lambda_.1} parent=0 // pred_fallthru
    _
  // Predicated region
  $region6: #{_lambda_.1} parent=0 // pred_check
    _
  $region7: #{_lambda_.1} parent=0 // pred_check_branch
    %10 = sbr.rel (0) target = $region9
  $region8: #{_lambda_.1} parent=0 // pred_region
    _
  $region9: #{_lambda_.1} parent=0 // pred_fallthru
    _
  %v11 = vld [vmem:[%s0] sm:$0xf]
  %v12 = vld [vmem:[%s0 + $0x4] sm:$0xf]
  %s13 = scalar_lea.vmem %s0, 8
  %v14 = vld [vmem:[%s13] sm:$0xf]
  %v15 = vld [vmem:[%s13 + $0x4] sm:$0xf]
  %v16 = vld [vmem:[%s1] sm:$0xf]
  %v17 = vld [vmem:[%s1 + $0x4] sm:$0xf]
  %v18 = vld [vmem:[%s1 + $0x8] sm:$0xf]
  %v19 = vld [vmem:[%s1 + $0xc] sm:$0xf]
  %s20 = scalar_lea.vmem %s1, 16
  %v21 = vld [vmem:[%s20] sm:$0xf]
  %v22 = vld [vmem:[%s20 + $0x4] sm:$0xf]
  %v23 = vld [vmem:[%s20 + $0x8] sm:$0xf]
  %v24 = vld [vmem:[%s20 + $0xc] sm:$0xf]
  %v25 = vlaneseq
  %v26 = vshrl.u32 %v25, 7
  %v27 = vsub.s32 0, %v26
  %v28 = vrot.slane %v11, %v27
  %v29 = vlaneseq
  %v30 = vshrl.u32 %v29, 7
  %v31 = vsub.s32 0, %v30
  %v32 = vrot.slane %v12, %v31
  %v33 = vmul.f32 %v28, %v16
  %v34 = vmul.f32 %v32, %v16
  %v35 = vlaneseq
  %v36 = vshrl.u32 %v35, 7
  %v37 = vsub.s32 0, %v36
  %v38 = vrot.slane %v14, %v37
  %v39 = vlaneseq
  %v40 = vshrl.u32 %v39, 7
  %v41 = vsub.s32 0, %v40
  %v42 = vrot.slane %v15, %v41
  %v43 = vmul.f32 %v38, %v21
  %v44 = vmul.f32 %v42, %v21
  %v45 = vsub.f32 %v33, %v43
  %v46 = vsub.f32 %v34, %v44
  %v47 = vmul.f32 %v28, %v21
  %v48 = vmul.f32 %v32, %v21
  %v49 = vmul.f32 %v38, %v16
  %v50 = vmul.f32 %v42, %v16
  %v51 = vadd.f32 %v47, %v49
  %v52 = vadd.f32 %v48, %v50
  %v53 = vlaneseq
  %v54 = vshrl.u32 %v53, 7
  %v55 = vsub.s32 1, %v54
  %v56 = vrot.slane %v11, %v55
  %v57 = vlaneseq
  %v58 = vshrl.u32 %v57, 7
  %v59 = vsub.s32 1, %v58
  %v60 = vrot.slane %v12, %v59
  %v61 = vmul.f32 %v56, %v17
  %v62 = vmul.f32 %v60, %v17
  %v63 = vlaneseq
  %v64 = vshrl.u32 %v63, 7
  %v65 = vsub.s32 1, %v64
  %v66 = vrot.slane %v14, %v65
  %v67 = vlaneseq
  %v68 = vshrl.u32 %v67, 7
  %v69 = vsub.s32 1, %v68
  %v70 = vrot.slane %v15, %v69
  %v71 = vmul.f32 %v66, %v22
  %v72 = vmul.f32 %v70, %v22
  %v73 = vsub.f32 %v61, %v71
  %v74 = vsub.f32 %v62, %v72
  %v75 = vmul.f32 %v56, %v22
  %v76 = vmul.f32 %v60, %v22
  %v77 = vmul.f32 %v66, %v17
  %v78 = vmul.f32 %v70, %v17
  %v79 = vadd.f32 %v75, %v77
  %v80 = vadd.f32 %v76, %v78
  %v81 = vadd.f32 %v45, %v73
  %v82 = vadd.f32 %v46, %v74
  %v83 = vadd.f32 %v51, %v79
  %v84 = vadd.f32 %v52, %v80
  %v85 = vlaneseq
  %v86 = vshrl.u32 %v85, 7
  %v87 = vsub.s32 2, %v86
  %v88 = vrot.slane %v11, %v87
  %v89 = vlaneseq
  %v90 = vshrl.u32 %v89, 7
  %v91 = vsub.s32 2, %v90
  %v92 = vrot.slane %v12, %v91
  %v93 = vmul.f32 %v88, %v18
  %v94 = vmul.f32 %v92, %v18
  %v95 = vlaneseq
  %v96 = vshrl.u32 %v95, 7
  %v97 = vsub.s32 2, %v96
  %v98 = vrot.slane %v14, %v97
  %v99 = vlaneseq
  %v100 = vshrl.u32 %v99, 7
  %v101 = vsub.s32 2, %v100
  %v102 = vrot.slane %v15, %v101
  %v103 = vmul.f32 %v98, %v23
  %v104 = vmul.f32 %v102, %v23
  %v105 = vsub.f32 %v93, %v103
  %v106 = vsub.f32 %v94, %v104
  %v107 = vmul.f32 %v88, %v23
  %v108 = vmul.f32 %v92, %v23
  %v109 = vmul.f32 %v98, %v18
  %v110 = vmul.f32 %v102, %v18
  %v111 = vadd.f32 %v107, %v109
  %v112 = vadd.f32 %v108, %v110
  %v113 = vadd.f32 %v81, %v105
  %v114 = vadd.f32 %v82, %v106
  %v115 = vadd.f32 %v83, %v111
  %v116 = vadd.f32 %v84, %v112
  %v117 = vlaneseq
  %v118 = vshrl.u32 %v117, 7
  %v119 = vsub.s32 3, %v118
  %v120 = vrot.slane %v11, %v119
  %v121 = vlaneseq
  %v122 = vshrl.u32 %v121, 7
  %v123 = vsub.s32 3, %v122
  %v124 = vrot.slane %v12, %v123
  %v125 = vmul.f32 %v120, %v19
  %v126 = vmul.f32 %v124, %v19
  %v127 = vlaneseq
  %v128 = vshrl.u32 %v127, 7
  %v129 = vsub.s32 3, %v128
  %v130 = vrot.slane %v14, %v129
  %v131 = vlaneseq
  %v132 = vshrl.u32 %v131, 7
  %v133 = vsub.s32 3, %v132
  %v134 = vrot.slane %v15, %v133
  %v135 = vmul.f32 %v130, %v24
  %v136 = vmul.f32 %v134, %v24
  %v137 = vsub.f32 %v125, %v135
  %v138 = vsub.f32 %v126, %v136
  %v139 = vmul.f32 %v120, %v24
  %v140 = vmul.f32 %v124, %v24
  %v141 = vmul.f32 %v130, %v19
  %v142 = vmul.f32 %v134, %v19
  %v143 = vadd.f32 %v139, %v141
  %v144 = vadd.f32 %v140, %v142
  %v145 = vadd.f32 %v113, %v137
  %v146 = vadd.f32 %v114, %v138
  %v147 = vadd.f32 %v115, %v143
  %v148 = vadd.f32 %v116, %v144
  %149 = vst [vmem:[%s2] sm:$0xf] %v145
  %150 = vst [vmem:[%s2 + $0x4] sm:$0xf] %v146
  %s151 = scalar_lea.vmem %s2, 8
  %152 = vst [vmem:[%s151] sm:$0xf] %v147
  %153 = vst [vmem:[%s151 + $0x4] sm:$0xf] %v148
  // Predicated region
  $region10: #{_lambda_.1} parent=0 // pred_check
    _
  $region11: #{_lambda_.1} parent=0 // pred_check_branch
    %155 = sbr.rel (0) target = $region13
  $region12: #{_lambda_.1} parent=0 // pred_region
    _
  $region13: #{_lambda_.1} parent=0 // pred_fallthru
    _
  // Predicated region
  $region14: #{_lambda_.1} parent=0 // pred_check
    _
  $region15: #{_lambda_.1} parent=0 // pred_check_branch
    %157 = sbr.rel (0) target = $region17
  $region16: #{_lambda_.1} parent=0 // pred_region
    _
  $region17: #{_lambda_.1} parent=0 // pred_fallthru
    _

// kernel: reverse.0
$region0: #{reverse.0}
  %s0 = inlined_call_operand.vmem [shape: f32[2,4,16,7], index: 0, kind: input, shape index: {}]
  %s1 = inlined_call_operand.vmem [shape: f32[2,4,16,7], index: 1, kind: output, shape index: {}]
  $region1: #{reverse.0} parent=0
    #allocation0 [shape = 'u8[65536]{0}', space=vmem, size = 0x10000, scoped, tag = 'operand span for operand 0']
    #allocation1 [shape = 'u8[32768]{0}', space=vmem, size = 0x8000, scoped, tag = 'operand span for operand 1']
    %s2 = scalar_lea.vmem [#allocation0], 8
    // Predicated region
    $region2: #{reverse.0} parent=1 // pred_check
      _
    $region3: #{reverse.0} parent=1 // pred_check_branch
      %4 = sbr.rel (0) target = $region5
    $region4: #{reverse.0} parent=1 // pred_region
      // Predicated region
      $region6: #{reverse.0} parent=4 // pred_check
        _
      $region7: #{reverse.0} parent=4 // pred_check_branch
        %6 = sbr.rel (0) target = $region9
      $region8: #{reverse.0} parent=4 // pred_region
        // Predicated region
        $region21: #{reverse.0} parent=8 // pred_check
          _
        $region22: #{reverse.0} parent=8 // pred_check_branch
          %35 = sbr.rel (0) target = $region24
        $region23: #{reverse.0} parent=8 // pred_region
          loop: start=0, step=1, limit=1
          $region25: #{reverse.0} parent=23 // loop_pre_header
            _
          $region26: #{reverse.0} parent=23 // loop_header
            %s37 = sphi 0, %s41
            %p38 = scmp.ge.s32.totalorder %s37, 1
            %s42 = sphi %s0, %s0
            %s43 = sphi %s2, %s2
          $region27: #{reverse.0} parent=23 // loop_header_branch
            %40 = sbr.rel (%p38) target = $region31
          $region28: #{reverse.0} parent=23 // loop_body
            %v44 = vld [vmem:[%s42] sm:$0xff]
            %45 = vst [vmem:[%s43] sm:$0xff] %v44
            %v46 = vld [vmem:[%s42 + $0x8] sm:$0xff]
            %47 = vst [vmem:[%s43 + $0x10] sm:$0xff] %v46
            %v48 = vld [vmem:[%s42 + $0x10] sm:$0xff]
            %49 = vst [vmem:[%s43 + $0x20] sm:$0xff] %v48
            %v50 = vld [vmem:[%s42 + $0x18] sm:$0xff]
            %51 = vst [vmem:[%s43 + $0x30] sm:$0xff] %v50
            %v52 = vld [vmem:[%s42 + $0x20] sm:$0xff]
            %53 = vst [vmem:[%s43 + $0x40] sm:$0xff] %v52
            %v54 = vld [vmem:[%s42 + $0x28] sm:$0xff]
            %55 = vst [vmem:[%s43 + $0x50] sm:$0xff] %v54
            %v56 = vld [vmem:[%s42 + $0x30] sm:$0xff]
            %57 = vst [vmem:[%s43 + $0x60] sm:$0xff] %v56
            %v58 = vld [vmem:[%s42 + $0x38] sm:$0xff]
            %59 = vst [vmem:[%s43 + $0x70] sm:$0xff] %v58
          $region29: #{reverse.0} parent=23 // loop_footer
            %s41 = sadd.s32 1, %s37
          $region30: #{reverse.0} parent=23 // loop_footer_branch
            %36 = sbr.rel target = $region26
          $region31: #{reverse.0} parent=23 // loop_exit
            _
        $region24: #{reverse.0} parent=8 // pred_fallthru
          _
        // Predicated region
        $region32: #{reverse.0} parent=8 // pred_check
          _
        $region33: #{reverse.0} parent=8 // pred_check_branch
          %61 = sbr.rel target = $region35
        $region34: #{reverse.0} parent=8 // pred_region
          _
        $region35: #{reverse.0} parent=8 // pred_fallthru
          _
      $region9: #{reverse.0} parent=4 // pred_fallthru
        _
      // Predicated region
      $region10: #{reverse.0} parent=4 // pred_check
        _
      $region11: #{reverse.0} parent=4 // pred_check_branch
        %8 = sbr.rel target = $region13
      $region12: #{reverse.0} parent=4 // pred_region
        loop: start=0, step=1, limit=1
        $region14: #{reverse.0} parent=12 // loop_pre_header
          _
        $region15: #{reverse.0} parent=12 // loop_header
          %s11 = sphi 0, %s15
          %p12 = scmp.ge.s32.totalorder %s11, 1
          %s16 = sphi %s0, %s0
          %s17 = sphi %s2, %s2
        $region16: #{reverse.0} parent=12 // loop_header_branch
          %14 = sbr.rel (%p12) target = $region20
        $region17: #{reverse.0} parent=12 // loop_body
          %v18 = vld [vmem:[%s16] sm:$0xff]
          %19 = vst [vmem:[%s17] sm:$0xff] %v18
          %v20 = vld [vmem:[%s16 + $0x8] sm:$0xff]
          %21 = vst [vmem:[%s17 + $0x10] sm:$0xff] %v20
          %v22 = vld [vmem:[%s16 + $0x10] sm:$0xff]
          %23 = vst [vmem:[%s17 + $0x20] sm:$0xff] %v22
          %v24 = vld [vmem:[%s16 + $0x18] sm:$0xff]
          %25 = vst [vmem:[%s17 + $0x30] sm:$0xff] %v24
          %v26 = vld [vmem:[%s16 + $0x20] sm:$0xff]
          %27 = vst [vmem:[%s17 + $0x40] sm:$0xff] %v26
          %v28 = vld [vmem:[%s16 + $0x28] sm:$0xff]
          %29 = vst [vmem:[%s17 + $0x50] sm:$0xff] %v28
          %v30 = vld [vmem:[%s16 + $0x30] sm:$0xff]
          %31 = vst [vmem:[%s17 + $0x60] sm:$0xff] %v30
          %v32 = vld [vmem:[%s16 + $0x38] sm:$0xff]
          %33 = vst [vmem:[%s17 + $0x70] sm:$0xff] %v32
        $region18: #{reverse.0} parent=12 // loop_footer
          %s15 = sadd.s32 1, %s11
        $region19: #{reverse.0} parent=12 // loop_footer_branch
          %10 = sbr.rel target = $region15
        $region20: #{reverse.0} parent=12 // loop_exit
          _
      $region13: #{reverse.0} parent=4 // pred_fallthru
        _
    $region5: #{reverse.0} parent=1 // pred_fallthru
      _
    %62 = vnop
    %s63 = scalar_lea.vmem [#allocation0], 7
    %v64 = vld [vmem:[%s63] ss:$-1 sm:$0xff]
    %v65 = vrot.slane %v64, 1
    %66 = vst [vmem:[#allocation1] sm:$0xff] %v65
    %s67 = scalar_lea.vmem [#allocation0], 8
    %s68 = scalar_lea.vmem %s67, 7 [#allocation0]
    %v69 = vld [vmem:[%s68] ss:$-1 sm:$0xff]
    %v70 = vrot.slane %v69, 1
    %v71 = vlaneseq
    %v72 = vshrl.u32 %v71, 7
    %vm73 = vcmp.lt.s32.totalorder %v72, 7
    %74 = vst.msk [vmem:[#allocation1] sm:$0xff] %vm73, %v70
    %s75 = scalar_lea.vmem [#allocation1], 8
    %s76 = scalar_lea.vmem [#allocation0], 16
    %s77 = scalar_lea.vmem %s76, 7 [#allocation0]
    %v78 = vld [vmem:[%s77] ss:$-1 sm:$0xff]
    %v79 = vrot.slane %v78, 1
    %80 = vst [vmem:[%s75] sm:$0xff] %v79
    %s81 = scalar_lea.vmem %s76, 8 [#allocation0]
    %s82 = scalar_lea.vmem %s81, 7 [#allocation0]
    %v83 = vld [vmem:[%s82] ss:$-1 sm:$0xff]
    %v84 = vrot.slane %v83, 1
    %v85 = vlaneseq
    %v86 = vshrl.u32 %v85, 7
    %vm87 = vcmp.lt.s32.totalorder %v86, 7
    %88 = vst.msk [vmem:[%s75] sm:$0xff] %vm87, %v84
    %s89 = scalar_lea.vmem [#allocation1], 16
    %s90 = scalar_lea.vmem [#allocation0], 32
    %s91 = scalar_lea.vmem %s90, 7 [#allocation0]
    %v92 = vld [vmem:[%s91] ss:$-1 sm:$0xff]
    %v93 = vrot.slane %v92, 1
    %94 = vst [vmem:[%s89] sm:$0xff] %v93
    %s95 = scalar_lea.vmem %s90, 8 [#allocation0]
    %s96 = scalar_lea.vmem %s95, 7 [#allocation0]
    %v97 = vld [vmem:[%s96] ss:$-1 sm:$0xff]
    %v98 = vrot.slane %v97, 1
    %v99 = vlaneseq
    %v100 = vshrl.u32 %v99, 7
    %vm101 = vcmp.lt.s32.totalorder %v100, 7
    %102 = vst.msk [vmem:[%s89] sm:$0xff] %vm101, %v98
    %s103 = scalar_lea.vmem [#allocation1], 24
    %s104 = scalar_lea.vmem [#allocation0], 48
    %s105 = scalar_lea.vmem %s104, 7 [#allocation0]
    %v106 = vld [vmem:[%s105] ss:$-1 sm:$0xff]
    %v107 = vrot.slane %v106, 1
    %108 = vst [vmem:[%s103] sm:$0xff] %v107
    %s109 = scalar_lea.vmem %s104, 8 [#allocation0]
    %s110 = scalar_lea.vmem %s109, 7 [#allocation0]
    %v111 = vld [vmem:[%s110] ss:$-1 sm:$0xff]
    %v112 = vrot.slane %v111, 1
    %v113 = vlaneseq
    %v114 = vshrl.u32 %v113, 7
    %vm115 = vcmp.lt.s32.totalorder %v114, 7
    %116 = vst.msk [vmem:[%s103] sm:$0xff] %vm115, %v112
    %s117 = scalar_lea.vmem [#allocation1], 32
    %s118 = scalar_lea.vmem [#allocation0], 64
    %s119 = scalar_lea.vmem %s118, 7 [#allocation0]
    %v120 = vld [vmem:[%s119] ss:$-1 sm:$0xff]
    %v121 = vrot.slane %v120, 1
    %122 = vst [vmem:[%s117] sm:$0xff] %v121
    %s123 = scalar_lea.vmem %s118, 8 [#allocation0]
    %s124 = scalar_lea.vmem %s123, 7 [#allocation0]
    %v125 = vld [vmem:[%s124] ss:$-1 sm:$0xff]
    %v126 = vrot.slane %v125, 1
    %v127 = vlaneseq
    %v128 = vshrl.u32 %v127, 7
    %vm129 = vcmp.lt.s32.totalorder %v128, 7
    %130 = vst.msk [vmem:[%s117] sm:$0xff] %vm129, %v126
    %s131 = scalar_lea.vmem [#allocation1], 40
    %s132 = scalar_lea.vmem [#allocation0], 80
    %s133 = scalar_lea.vmem %s132, 7 [#allocation0]
    %v134 = vld [vmem:[%s133] ss:$-1 sm:$0xff]
    %v135 = vrot.slane %v134, 1
    %136 = vst [vmem:[%s131] sm:$0xff] %v135
    %s137 = scalar_lea.vmem %s132, 8 [#allocation0]
    %s138 = scalar_lea.vmem %s137, 7 [#allocation0]
    %v139 = vld [vmem:[%s138] ss:$-1 sm:$0xff]
    %v140 = vrot.slane %v139, 1
    %v141 = vlaneseq
    %v142 = vshrl.u32 %v141, 7
    %vm143 = vcmp.lt.s32.totalorder %v142, 7
    %144 = vst.msk [vmem:[%s131] sm:$0xff] %vm143, %v140
    %s145 = scalar_lea.vmem [#allocation1], 48
    %s146 = scalar_lea.vmem [#allocation0], 96
    %s147 = scalar_lea.vmem %s146, 7 [#allocation0]
    %v148 = vld [vmem:[%s147] ss:$-1 sm:$0xff]
    %v149 = vrot.slane %v148, 1
    %150 = vst [vmem:[%s145] sm:$0xff] %v149
    %s151 = scalar_lea.vmem %s146, 8 [#allocation0]
    %s152 = scalar_lea.vmem %s151, 7 [#allocation0]
    %v153 = vld [vmem:[%s152] ss:$-1 sm:$0xff]
    %v154 = vrot.slane %v153, 1
    %v155 = vlaneseq
    %v156 = vshrl.u32 %v155, 7
    %vm157 = vcmp.lt.s32.totalorder %v156, 7
    %158 = vst.msk [vmem:[%s145] sm:$0xff] %vm157, %v154
    %s159 = scalar_lea.vmem [#allocation1], 56
    %s160 = scalar_lea.vmem [#allocation0], 112
    %s161 = scalar_lea.vmem %s160, 7 [#allocation0]
    %v162 = vld [vmem:[%s161] ss:$-1 sm:$0xff]
    %v163 = vrot.slane %v162, 1
    %164 = vst [vmem:[%s159] sm:$0xff] %v163
    %s165 = scalar_lea.vmem %s160, 8 [#allocation0]
    %s166 = scalar_lea.vmem %s165, 7 [#allocation0]
    %v167 = vld [vmem:[%s166] ss:$-1 sm:$0xff]
    %v168 = vrot.slane %v167, 1
    %v169 = vlaneseq
    %v170 = vshrl.u32 %v169, 7
    %vm171 = vcmp.lt.s32.totalorder %v170, 7
    %172 = vst.msk [vmem:[%s159] sm:$0xff] %vm171, %v168
    // Predicated region
    $region36: #{reverse.0} parent=1 // pred_check
      _
    $region37: #{reverse.0} parent=1 // pred_check_branch
      %174 = sbr.rel (0) target = $region39
    $region38: #{reverse.0} parent=1 // pred_region
      // Predicated region
      $region40: #{reverse.0} parent=38 // pred_check
        _
      $region41: #{reverse.0} parent=38 // pred_check_branch
        %176 = sbr.rel (0) target = $region43
      $region42: #{reverse.0} parent=38 // pred_region
        // Predicated region
        $region55: #{reverse.0} parent=42 // pred_check
          _
        $region56: #{reverse.0} parent=42 // pred_check_branch
          %205 = sbr.rel (0) target = $region58
        $region57: #{reverse.0} parent=42 // pred_region
          loop: start=0, step=1, limit=1
          $region59: #{reverse.0} parent=57 // loop_pre_header
            _
          $region60: #{reverse.0} parent=57 // loop_header
            %s207 = sphi 0, %s211
            %p208 = scmp.ge.s32.totalorder %s207, 1
            %s212 = sphi [#allocation1], [#allocation1]
            %s213 = sphi %s1, %s1
          $region61: #{reverse.0} parent=57 // loop_header_branch
            %210 = sbr.rel (%p208) target = $region65
          $region62: #{reverse.0} parent=57 // loop_body
            %v214 = vld [vmem:[%s212] sm:$0xff]
            %215 = vst [vmem:[%s213] sm:$0xff] %v214
            %v216 = vld [vmem:[%s212 + $0x8] sm:$0xff]
            %217 = vst [vmem:[%s213 + $0x8] sm:$0xff] %v216
            %v218 = vld [vmem:[%s212 + $0x10] sm:$0xff]
            %219 = vst [vmem:[%s213 + $0x10] sm:$0xff] %v218
            %v220 = vld [vmem:[%s212 + $0x18] sm:$0xff]
            %221 = vst [vmem:[%s213 + $0x18] sm:$0xff] %v220
            %v222 = vld [vmem:[%s212 + $0x20] sm:$0xff]
            %223 = vst [vmem:[%s213 + $0x20] sm:$0xff] %v222
            %v224 = vld [vmem:[%s212 + $0x28] sm:$0xff]
            %225 = vst [vmem:[%s213 + $0x28] sm:$0xff] %v224
            %v226 = vld [vmem:[%s212 + $0x30] sm:$0xff]
            %227 = vst [vmem:[%s213 + $0x30] sm:$0xff] %v226
            %v228 = vld [vmem:[%s212 + $0x38] sm:$0xff]
            %229 = vst [vmem:[%s213 + $0x38] sm:$0xff] %v228
          $region63: #{reverse.0} parent=57 // loop_footer
            %s211 = sadd.s32 1, %s207
          $region64: #{reverse.0} parent=57 // loop_footer_branch
            %206 = sbr.rel target = $region60
          $region65: #{reverse.0} parent=57 // loop_exit
            _
        $region58: #{reverse.0} parent=42 // pred_fallthru
          _
        // Predicated region
        $region66: #{reverse.0} parent=42 // pred_check
          _
        $region67: #{reverse.0} parent=42 // pred_check_branch
          %231 = sbr.rel target = $region69
        $region68: #{reverse.0} parent=42 // pred_region
          _
        $region69: #{reverse.0} parent=42 // pred_fallthru
          _
      $region43: #{reverse.0} parent=38 // pred_fallthru
        _
      // Predicated region
      $region44: #{reverse.0} parent=38 // pred_check
        _
      $region45: #{reverse.0} parent=38 // pred_check_branch
        %178 = sbr.rel target = $region47
      $region46: #{reverse.0} parent=38 // pred_region
        loop: start=0, step=1, limit=1
        $region48: #{reverse.0} parent=46 // loop_pre_header
          _
        $region49: #{reverse.0} parent=46 // loop_header
          %s181 = sphi 0, %s185
          %p182 = scmp.ge.s32.totalorder %s181, 1
          %s186 = sphi [#allocation1], [#allocation1]
          %s187 = sphi %s1, %s1
        $region50: #{reverse.0} parent=46 // loop_header_branch
          %184 = sbr.rel (%p182) target = $region54
        $region51: #{reverse.0} parent=46 // loop_body
          %v188 = vld [vmem:[%s186] sm:$0xff]
          %189 = vst [vmem:[%s187] sm:$0xff] %v188
          %v190 = vld [vmem:[%s186 + $0x8] sm:$0xff]
          %191 = vst [vmem:[%s187 + $0x8] sm:$0xff] %v190
          %v192 = vld [vmem:[%s186 + $0x10] sm:$0xff]
          %193 = vst [vmem:[%s187 + $0x10] sm:$0xff] %v192
          %v194 = vld [vmem:[%s186 + $0x18] sm:$0xff]
          %195 = vst [vmem:[%s187 + $0x18] sm:$0xff] %v194
          %v196 = vld [vmem:[%s186 + $0x20] sm:$0xff]
          %197 = vst [vmem:[%s187 + $0x20] sm:$0xff] %v196
          %v198 = vld [vmem:[%s186 + $0x28] sm:$0xff]
          %199 = vst [vmem:[%s187 + $0x28] sm:$0xff] %v198
          %v200 = vld [vmem:[%s186 + $0x30] sm:$0xff]
          %201 = vst [vmem:[%s187 + $0x30] sm:$0xff] %v200
          %v202 = vld [vmem:[%s186 + $0x38] sm:$0xff]
          %203 = vst [vmem:[%s187 + $0x38] sm:$0xff] %v202
        $region52: #{reverse.0} parent=46 // loop_footer
          %s185 = sadd.s32 1, %s181
        $region53: #{reverse.0} parent=46 // loop_footer_branch
          %180 = sbr.rel target = $region49
        $region54: #{reverse.0} parent=46 // loop_exit
          _
      $region47: #{reverse.0} parent=38 // pred_fallthru
        _
    $region39: #{reverse.0} parent=1 // pred_fallthru
      _
    %232 = vnop

</llo_original>
